<compile_context>
chip_gen: v7x
topology: tpu7x:2x2x1
jax: 0.10.0
libtpu: 0.0.40
codegen_flags: <defaults>
</compile_context>

<pallas_src>
import jax
import jax.numpy as jnp
from jax import lax
from jax.experimental import pallas as pl
from jax.experimental.pallas import tpu as pltpu

# ---------------- config (matches AudioQwen2Config defaults) -----------------
CODEBOOK_DIM = 128   # config.codebook_dim
HIDDEN_SIZE = 256    # config.hidden_size (small demo size, 128-aligned)


def _exact_gelu(x):
    # transformers ACT2FN['gelu'] == erf-based gelu (PyTorch default gelu).
    return 0.5 * x * (1.0 + lax.erf(x * 0.7071067811865476))


def projector_kernel(x_ref, w1_ref, b1_ref, w2_ref, b2_ref, o_ref):
    # x_ref: (tm, D) activation dtype; w1_ref: (D, H), w2_ref: (H, H) in the
    # compute dtype (bf16 fast path / f32 exact path); b1/b2: (1, H) f32.
    #
    # NOTE (ragged last row-block): rows past M contain stale VMEM data that
    # flows through the gelu and both matmuls.  This is safe ONLY because
    # every output row depends solely on its own input row (row-wise matmuls
    # + elementwise activation) and the padded rows are masked on the output
    # store.  Do not add cross-row ops (reductions / normalizations) here
    # without handling that padding explicitly.
    x = x_ref[...].astype(w1_ref.dtype)          # in-kernel cast (VPU, no extra HBM)
    h = jnp.dot(x, w1_ref[...], preferred_element_type=jnp.float32)
    h = _exact_gelu(h + b1_ref[...])             # bias + exact erf gelu in f32
    # Precision/perf knob: on the bf16 fast path the post-gelu h is cast to
    # bf16 before the second matmul (intentional deviation from PyTorch f32).
    y = jnp.dot(h.astype(w2_ref.dtype), w2_ref[...],
                preferred_element_type=jnp.float32)
    y = y + b2_ref[...]
    o_ref[...] = y.astype(o_ref.dtype)


def prepare_projector_params(w1, b1, w2, b2, compute_dtype=jnp.bfloat16):
    """Cast/shape parameters ONCE at model-load time (not per forward call).

    w1: (codebook_dim, hidden), w2: (hidden, hidden) -- PyTorch Linear weights
    transposed.  Weights go to `compute_dtype` (MXU operand dtype); biases are
    kept in f32 (bias add + gelu accumulate in f32 inside the kernel).
    """
    return (w1.astype(compute_dtype),
            b1.reshape(1, -1).astype(jnp.float32),
            w2.astype(compute_dtype),
            b2.reshape(1, -1).astype(jnp.float32))


def audio_qwen2_projector(audio_embeds, w1, b1, w2, b2, *, tm=None, out_dtype=None):
    """audio_embeds: (B, S, codebook_dim) -> (B, S, hidden_size).

    The MXU operand dtype is the dtype the weights are passed in (use
    prepare_projector_params to cast once).  Accumulation, bias add and the
    erf gelu are always f32.  out_dtype defaults to the weight dtype, so the
    bf16 fast path also writes a bf16 output (halving the dominant HBM stream)
    while the f32 exact path keeps a PyTorch-matching f32 output.
    """
    B, S, D = audio_embeds.shape
    H = w1.shape[1]
    M = B * S

    if out_dtype is None:
        out_dtype = w1.dtype
    out_dtype = jnp.dtype(out_dtype)

    # Sublane alignment for the activation dtype: 8 rows for 4-byte, 16 for
    # 2-byte, 32 for 1-byte element types.
    itemsize = jnp.dtype(audio_embeds.dtype).itemsize
    align = max(8, 32 // max(itemsize, 1))

    if tm is None:
        # Big row tiles amortize the ~0.35 us fixed per-grid-step cost on
        # v6e/v7x (2048 f32 rows ~= 1 MiB x-tile) while staying far under the
        # 32 MiB scoped-VMEM budget on every generation.
        target = 2048 if itemsize >= 4 else 4096
        if M <= target:
            tm = min(target, pl.cdiv(max(M, 1), align) * align)   # single block
        else:
            # Even number of near-equal row blocks so the 1-D "parallel" grid
            # splits evenly across v7x's two TensorCores (avoids a 2:1 step
            # imbalance), while staying close to the target tile on v5e/v6e.
            pairs = pl.cdiv(M, 2 * target)                        # grid_m = 2*pairs
            tm = pl.cdiv(pl.cdiv(M, 2 * pairs), align) * align
    else:
        tm = max(align, (tm // align) * align)
    tm = max(align, min(tm, pl.cdiv(M, align) * align))
    grid_m = pl.cdiv(M, tm)                                        # ragged last block OK

    x2 = audio_embeds.reshape(M, D)
    b1_2 = b1.reshape(1, H).astype(jnp.float32)   # no-op if prepared params are passed
    b2_2 = b2.reshape(1, H).astype(jnp.float32)

    # Resident operands (constant index maps) are fetched once; their unused
    # second pipeline buffer is <0.5 MiB, so pl.Buffered(1) is not needed at
    # these weight sizes even on v7x's smaller VMEM.
    out = pl.pallas_call(
        projector_kernel,
        out_shape=jax.ShapeDtypeStruct((M, H), out_dtype),
        grid_spec=pltpu.PrefetchScalarGridSpec(
            num_scalar_prefetch=0,
            grid=(grid_m,),
            in_specs=[
                pl.BlockSpec((tm, D), lambda i: (i, 0)),   # x row-tile (streamed)
                pl.BlockSpec((D, H), lambda i: (0, 0)),    # W1 (VMEM-resident)
                pl.BlockSpec((1, H), lambda i: (0, 0)),    # b1 (resident)
                pl.BlockSpec((H, H), lambda i: (0, 0)),    # W2 (resident)
                pl.BlockSpec((1, H), lambda i: (0, 0)),    # b2 (resident)
            ],
            out_specs=pl.BlockSpec((tm, H), lambda i: (i, 0)),
        ),
        compiler_params=pltpu.CompilerParams(
            dimension_semantics=("parallel",),
            vmem_limit_bytes=32 * 1024 * 1024),
    )(x2, w1, b1_2, w2, b2_2)
    return out.reshape(B, S, H)


def _reference(audio_embeds, w1, b1, w2, b2):
    h = jnp.einsum("bsd,dh->bsh", audio_embeds, w1) + b1
    h = _exact_gelu(h)
    return jnp.einsum("bsh,hk->bsk", h, w2) + b2


if __name__ == "__main__":
    key = jax.random.PRNGKey(0)
    kx, kw1, kb1, kw2, kb2 = jax.random.split(key, 5)

    B, S = 2, 8
    x = jax.random.normal(kx, (B, S, CODEBOOK_DIM), dtype=jnp.float32)

    # Deterministic synthetic parameters (Linear weights stored as (in, out)).
    w1 = 0.02 * jax.random.normal(kw1, (CODEBOOK_DIM, HIDDEN_SIZE), dtype=jnp.float32)
    b1 = 0.01 * jax.random.normal(kb1, (HIDDEN_SIZE,), dtype=jnp.float32)
    w2 = 0.02 * jax.random.normal(kw2, (HIDDEN_SIZE, HIDDEN_SIZE), dtype=jnp.float32)
    b2 = 0.01 * jax.random.normal(kb2, (HIDDEN_SIZE,), dtype=jnp.float32)

    y_ref = _reference(x, w1, b1, w2, b2)

    # Exact path: f32 weights -> f32 MXU operands + f32 output (PyTorch numerics).
    y_f32 = jax.block_until_ready(audio_qwen2_projector(x, w1, b1, w2, b2))
    assert y_f32.shape == (B, S, HIDDEN_SIZE) and y_f32.dtype == jnp.float32
    assert jnp.allclose(y_f32, y_ref, atol=1e-5, rtol=1e-5), "f32 mismatch vs reference"

    # Fast path: weights cast to bf16 ONCE (model-load time); bf16 output.
    params_bf16 = prepare_projector_params(w1, b1, w2, b2, compute_dtype=jnp.bfloat16)
    y_bf16 = jax.block_until_ready(audio_qwen2_projector(x, *params_bf16))
    assert y_bf16.shape == (B, S, HIDDEN_SIZE) and y_bf16.dtype == jnp.bfloat16
    assert jnp.allclose(y_bf16.astype(jnp.float32), y_ref,
                        atol=2e-2, rtol=2e-2), "bf16 mismatch vs reference"

    # Ragged token count (M = 15: single masked row block).
    x_r = jax.random.normal(kx, (3, 5, CODEBOOK_DIM), dtype=jnp.float32)
    y_r = jax.block_until_ready(audio_qwen2_projector(x_r, *params_bf16))
    assert jnp.allclose(y_r.astype(jnp.float32), _reference(x_r, w1, b1, w2, b2),
                        atol=2e-2, rtol=2e-2), "ragged mismatch vs reference"

    # Multi-step grid with a ragged last block (forced small row tile).
    x_m = jax.random.normal(kx, (2, 100, CODEBOOK_DIM), dtype=jnp.float32)
    y_m = jax.block_until_ready(audio_qwen2_projector(x_m, *params_bf16, tm=64))
    assert jnp.allclose(y_m.astype(jnp.float32), _reference(x_m, w1, b1, w2, b2),
                        atol=2e-2, rtol=2e-2), "multi-tile mismatch vs reference"

    print("KERNEL_OK")
</pallas_src>

<mosaic_0001>
module attributes {stable_mosaic.version = 11 : i64} {
  func.func @projector_kernel(%arg0: i32, %arg1: memref<16x128xf32, #tpu.memory_space<vmem>>, %arg2: memref<128x256xf32, #tpu.memory_space<vmem>>, %arg3: memref<1x256xf32, #tpu.memory_space<vmem>>, %arg4: memref<256x256xf32, #tpu.memory_space<vmem>>, %arg5: memref<1x256xf32, #tpu.memory_space<vmem>>, %arg6: memref<16x256xf32, #tpu.memory_space<vmem>>) attributes {dimension_semantics = [#tpu.dimension_semantics<parallel>], iteration_bounds = array<i64: 1>, scalar_prefetch = 0 : i64, scratch_operands = 0 : i64, tpu.core_type = #tpu.core_type<tc>, window_params = [{transform_indices = @transform_0, window_bounds = array<i64: 16, 128>}, {pipeline_mode = #tpu.pipeline_mode<synchronous>, transform_indices = @transform_1, window_bounds = array<i64: 128, 256>}, {pipeline_mode = #tpu.pipeline_mode<synchronous>, transform_indices = @transform_2, window_bounds = array<i64: 1, 256>}, {pipeline_mode = #tpu.pipeline_mode<synchronous>, transform_indices = @transform_3, window_bounds = array<i64: 256, 256>}, {pipeline_mode = #tpu.pipeline_mode<synchronous>, transform_indices = @transform_4, window_bounds = array<i64: 1, 256>}, {transform_indices = @transform_5, window_bounds = array<i64: 16, 256>}]} {
    %c0 = arith.constant 0 : index
    %c0_0 = arith.constant 0 : index
    %0 = vector.load %arg1[%c0, %c0_0] : memref<16x128xf32, #tpu.memory_space<vmem>>, vector<16x128xf32>
    %c0_1 = arith.constant 0 : index
    %c0_2 = arith.constant 0 : index
    %1 = vector.load %arg2[%c0_1, %c0_2] : memref<128x256xf32, #tpu.memory_space<vmem>>, vector<128x256xf32>
    %cst = arith.constant dense<0.000000e+00> : vector<16x256xf32>
    %2 = tpu.matmul %0, %1, %cst {dimension_numbers = #tpu.dot_dimension_numbers<[1], [0], [0], [1], [0, 0, 1, 1], [], []>} : vector<16x128xf32>, vector<128x256xf32>, vector<16x256xf32> -> vector<16x256xf32>
    %c0_3 = arith.constant 0 : index
    %c0_4 = arith.constant 0 : index
    %3 = vector.load %arg3[%c0_3, %c0_4] : memref<1x256xf32, #tpu.memory_space<vmem>>, vector<1x256xf32>
    %4 = vector.broadcast %3 : vector<1x256xf32> to vector<16x256xf32>
    %5 = arith.addf %2, %4 : vector<16x256xf32>
    %cst_5 = arith.constant 5.000000e-01 : f32
    %6 = vector.broadcast %cst_5 : f32 to vector<16x256xf32>
    %7 = arith.mulf %6, %5 : vector<16x256xf32>
    %cst_6 = arith.constant 0.707106769 : f32
    %8 = vector.broadcast %cst_6 : f32 to vector<16x256xf32>
    %9 = arith.mulf %5, %8 : vector<16x256xf32>
    %10 = math.erf %9 : vector<16x256xf32>
    %cst_7 = arith.constant 1.000000e+00 : f32
    %11 = vector.broadcast %cst_7 : f32 to vector<16x256xf32>
    %12 = arith.addf %11, %10 : vector<16x256xf32>
    %13 = arith.mulf %7, %12 : vector<16x256xf32>
    %c0_8 = arith.constant 0 : index
    %c0_9 = arith.constant 0 : index
    %14 = vector.load %arg4[%c0_8, %c0_9] : memref<256x256xf32, #tpu.memory_space<vmem>>, vector<256x256xf32>
    %cst_10 = arith.constant dense<0.000000e+00> : vector<16x256xf32>
    %15 = tpu.matmul %13, %14, %cst_10 {dimension_numbers = #tpu.dot_dimension_numbers<[1], [0], [0], [1], [0, 0, 1, 1], [], []>} : vector<16x256xf32>, vector<256x256xf32>, vector<16x256xf32> -> vector<16x256xf32>
    %c0_11 = arith.constant 0 : index
    %c0_12 = arith.constant 0 : index
    %16 = vector.load %arg5[%c0_11, %c0_12] : memref<1x256xf32, #tpu.memory_space<vmem>>, vector<1x256xf32>
    %17 = vector.broadcast %16 : vector<1x256xf32> to vector<16x256xf32>
    %18 = arith.addf %15, %17 : vector<16x256xf32>
    %c0_13 = arith.constant 0 : index
    %c0_14 = arith.constant 0 : index
    %19 = vector.load %arg6[%c0_13, %c0_14] : memref<16x256xf32, #tpu.memory_space<vmem>>, vector<16x256xf32>
    tpu.vector_store %arg6[%c0_13, %c0_14], %18 {strides = array<i32>} : memref<16x256xf32, #tpu.memory_space<vmem>>, vector<16x256xf32>,
    return
  }
  func.func @transform_0(%arg0: i32) -> (i32, i32) {
    %c0_i32 = arith.constant 0 : i32
    %c0_i32_0 = arith.constant 0 : i32
    return %arg0, %c0_i32 : i32, i32
  }
  func.func @transform_1(%arg0: i32) -> (i32, i32) {
    %c0_i32 = arith.constant 0 : i32
    %c0_i32_0 = arith.constant 0 : i32
    %c0_i32_1 = arith.constant 0 : i32
    return %c0_i32, %c0_i32_0 : i32, i32
  }
  func.func @transform_2(%arg0: i32) -> (i32, i32) {
    %c0_i32 = arith.constant 0 : i32
    %c0_i32_0 = arith.constant 0 : i32
    %c0_i32_1 = arith.constant 0 : i32
    return %c0_i32, %c0_i32_0 : i32, i32
  }
  func.func @transform_3(%arg0: i32) -> (i32, i32) {
    %c0_i32 = arith.constant 0 : i32
    %c0_i32_0 = arith.constant 0 : i32
    %c0_i32_1 = arith.constant 0 : i32
    return %c0_i32, %c0_i32_0 : i32, i32
  }
  func.func @transform_4(%arg0: i32) -> (i32, i32) {
    %c0_i32 = arith.constant 0 : i32
    %c0_i32_0 = arith.constant 0 : i32
    %c0_i32_1 = arith.constant 0 : i32
    return %c0_i32, %c0_i32_0 : i32, i32
  }
  func.func @transform_5(%arg0: i32) -> (i32, i32) {
    %c0_i32 = arith.constant 0 : i32
    %c0_i32_0 = arith.constant 0 : i32
    return %arg0, %c0_i32 : i32, i32
  }
}

</mosaic_0001>

<llo_original>
// kernel: tpu_custom_call.1
$region0: #{tpu_custom_call.1}
  #allocation0 [shape = 'u32[]', space=smem, size = 0x4, offset = 0x4, fixed_abs, tag = 'smem constant byte address 0x4 - core index']
  #allocation1 [shape = 'u32[144,128]{1,0:T(1,128)}', space=vmem, size = 0x12000, scoped, tag = 'internal scratch']
  %s0 = inlined_call_operand.hbm [shape: f32[16,128], index: 0, kind: input, shape index: {}]
  %s1 = inlined_call_operand.hbm [shape: f32[128,256], index: 1, kind: input, shape index: {}]
  %s2 = inlined_call_operand.vmem [shape: f32[1,256], index: 2, kind: input, shape index: {}]
  %s3 = inlined_call_operand.hbm [shape: f32[256,256], index: 3, kind: input, shape index: {}]
  %s4 = inlined_call_operand.vmem [shape: f32[1,256], index: 4, kind: input, shape index: {}]
  %s5 = inlined_call_operand.hbm [shape: f32[16,256], index: 5, kind: output, shape index: {}]
  %s6 = sld [smem:[#allocation0]]
  $region42: #{tpu_custom_call.1} parent=0
    _
  %s8 = ssub.s32 1, %s6
  %s9 = scalar_select 0, %s8, %s6
  $region1: #{tpu_custom_call.1} parent=0
    #allocation2 [shape = 'u8[8192]{0}', space=vmem, size = 0x2000, scoped, tag = 'input window, operand 0, single buffered']
    #allocation3 [shape = 's32[1]{0}', space=sflag, size = 0x4, scoped, tag = 'scoped memory for tpu_custom_call.1']
    #allocation4 [shape = 's32[1]{0}', space=sflag, size = 0x4, scoped, tag = 'scoped memory for tpu_custom_call.1']
    #allocation5 [shape = 'u8[131072]{0}', space=vmem, size = 0x20000, scoped, tag = 'input window, operand 1, single buffered']
    #allocation6 [shape = 's32[1]{0}', space=sflag, size = 0x4, scoped, tag = 'scoped memory for tpu_custom_call.1']
    #allocation7 [shape = 'u8[262144]{0}', space=vmem, size = 0x40000, scoped, tag = 'input window, operand 3, single buffered']
    #allocation8 [shape = 'u8[16384]{0}', space=vmem, size = 0x4000, scoped, tag = 'output window, operand 0, single buffered']
    %10 = vsyncpa [#allocation3], 0
    %11 = vsyncpa [#allocation6], 0
    %12 = vsyncpa [#allocation4], 0
    // Predicated region
    $region2: #{tpu_custom_call.1} parent=1 // pred_check
      _
    $region3: #{tpu_custom_call.1} parent=1 // pred_check_branch
      %14 = sbr.rel (0) target = $region5
    $region4: #{tpu_custom_call.1} parent=1 // pred_region
      %s16 = ssub.s32 256, 256
      %17 = vsyncadd [#allocation3], %s16
      %s18 = sshll.u32 [#allocation2], 4
      %s19 = int_to_ptr.vmem [resolvable:$true] %s18
      %24 = dma.hbm_to_vmem [thread:$0]  %s0, 256, %s19, [#allocation3], 128, 128, 8
    $region5: #{tpu_custom_call.1} parent=1 // pred_fallthru
      _
    // Predicated region
    $region6: #{tpu_custom_call.1} parent=1 // pred_check
      _
    $region7: #{tpu_custom_call.1} parent=1 // pred_check_branch
      %26 = sbr.rel (0) target = $region9
    $region8: #{tpu_custom_call.1} parent=1 // pred_region
      %s28 = ssub.s32 4096, 4096
      %29 = vsyncadd [#allocation6], %s28
      %s30 = sshll.u32 [#allocation5], 4
      %s31 = int_to_ptr.vmem [resolvable:$true] %s30
      %36 = dma.hbm_to_vmem [thread:$0]  %s1, 4096, %s31, [#allocation6], 256, 256, 16
    $region9: #{tpu_custom_call.1} parent=1 // pred_fallthru
      _
    // Predicated region
    $region10: #{tpu_custom_call.1} parent=1 // pred_check
      _
    $region11: #{tpu_custom_call.1} parent=1 // pred_check_branch
      %38 = sbr.rel (0) target = $region13
    $region12: #{tpu_custom_call.1} parent=1 // pred_region
      _
    $region13: #{tpu_custom_call.1} parent=1 // pred_fallthru
      _
    // Predicated region
    $region14: #{tpu_custom_call.1} parent=1 // pred_check
      _
    $region15: #{tpu_custom_call.1} parent=1 // pred_check_branch
      %40 = sbr.rel (0) target = $region17
    $region16: #{tpu_custom_call.1} parent=1 // pred_region
      %s42 = ssub.s32 8192, 8192
      %43 = vsyncadd [#allocation6], %s42
      %s44 = sshll.u32 [#allocation7], 4
      %s45 = int_to_ptr.vmem [resolvable:$true] %s44
      %50 = dma.hbm_to_vmem [thread:$0]  %s3, 8192, %s45, [#allocation6], 256, 256, 16
    $region17: #{tpu_custom_call.1} parent=1 // pred_fallthru
      _
    // Predicated region
    $region18: #{tpu_custom_call.1} parent=1 // pred_check
      _
    $region19: #{tpu_custom_call.1} parent=1 // pred_check_branch
      %52 = sbr.rel (0) target = $region21
    $region20: #{tpu_custom_call.1} parent=1 // pred_region
      _
    $region21: #{tpu_custom_call.1} parent=1 // pred_fallthru
      _
    // Predicated region
    $region22: #{tpu_custom_call.1} parent=1 // pred_check
      _
    $region23: #{tpu_custom_call.1} parent=1 // pred_check_branch
      %54 = sbr.rel (0) target = $region25
    $region24: #{tpu_custom_call.1} parent=1 // pred_region
      %55 = dma.done [#allocation3], 256
    $region25: #{tpu_custom_call.1} parent=1 // pred_fallthru
      _
    // Predicated region
    $region26: #{tpu_custom_call.1} parent=1 // pred_check
      _
    $region27: #{tpu_custom_call.1} parent=1 // pred_check_branch
      %57 = sbr.rel (0) target = $region29
    $region28: #{tpu_custom_call.1} parent=1 // pred_region
      %58 = dma.done [#allocation6], 4096
    $region29: #{tpu_custom_call.1} parent=1 // pred_fallthru
      _
    // Predicated region
    $region30: #{tpu_custom_call.1} parent=1 // pred_check
      _
    $region31: #{tpu_custom_call.1} parent=1 // pred_check_branch
      %60 = sbr.rel (0) target = $region33
    $region32: #{tpu_custom_call.1} parent=1 // pred_region
      %61 = dma.done [#allocation6], 8192
    $region33: #{tpu_custom_call.1} parent=1 // pred_fallthru
      _
    %v62 = vld [vmem:[#allocation2] sm:$0xff]
    %v63 = vld [vmem:[#allocation2 + $0x8] sm:$0xff]
    %v64 = vld [vmem:[#allocation5] sm:$0xff]
    %v65 = vld [vmem:[#allocation5 + $0x8] sm:$0xff]
    %v66 = vld [vmem:[#allocation5 + $0x10] sm:$0xff]
    %v67 = vld [vmem:[#allocation5 + $0x18] sm:$0xff]
    %v68 = vld [vmem:[#allocation5 + $0x20] sm:$0xff]
    %v69 = vld [vmem:[#allocation5 + $0x28] sm:$0xff]
    %v70 = vld [vmem:[#allocation5 + $0x30] sm:$0xff]
    %v71 = vld [vmem:[#allocation5 + $0x38] sm:$0xff]
    %v72 = vld [vmem:[#allocation5 + $0x40] sm:$0xff]
    %v73 = vld [vmem:[#allocation5 + $0x48] sm:$0xff]
    %v74 = vld [vmem:[#allocation5 + $0x50] sm:$0xff]
    %v75 = vld [vmem:[#allocation5 + $0x58] sm:$0xff]
    %v76 = vld [vmem:[#allocation5 + $0x60] sm:$0xff]
    %v77 = vld [vmem:[#allocation5 + $0x68] sm:$0xff]
    %v78 = vld [vmem:[#allocation5 + $0x70] sm:$0xff]
    %v79 = vld [vmem:[#allocation5 + $0x78] sm:$0xff]
    %v80 = vld [vmem:[#allocation5 + $0x80] sm:$0xff]
    %v81 = vld [vmem:[#allocation5 + $0x88] sm:$0xff]
    %v82 = vld [vmem:[#allocation5 + $0x90] sm:$0xff]
    %v83 = vld [vmem:[#allocation5 + $0x98] sm:$0xff]
    %v84 = vld [vmem:[#allocation5 + $0xa0] sm:$0xff]
    %v85 = vld [vmem:[#allocation5 + $0xa8] sm:$0xff]
    %v86 = vld [vmem:[#allocation5 + $0xb0] sm:$0xff]
    %v87 = vld [vmem:[#allocation5 + $0xb8] sm:$0xff]
    %v88 = vld [vmem:[#allocation5 + $0xc0] sm:$0xff]
    %v89 = vld [vmem:[#allocation5 + $0xc8] sm:$0xff]
    %v90 = vld [vmem:[#allocation5 + $0xd0] sm:$0xff]
    %v91 = vld [vmem:[#allocation5 + $0xd8] sm:$0xff]
    %v92 = vld [vmem:[#allocation5 + $0xe0] sm:$0xff]
    %v93 = vld [vmem:[#allocation5 + $0xe8] sm:$0xff]
    %v94 = vld [vmem:[#allocation5 + $0xf0] sm:$0xff]
    %v95 = vld [vmem:[#allocation5 + $0xf8] sm:$0xff]
    %v96 = vld [vmem:[%s2] sm:$0x3]
    %v98 = vlaneseq
    %v99 = vshrl.u32 %v98, 7
    %v100 = vsub.s32 0, %v99
    %v101 = vrot.slane %v96, %v100
    %v102 = vlaneseq
    %v103 = vshrl.u32 %v102, 7
    %v104 = vsub.s32 1, %v103
    %v105 = vrot.slane %v96, %v104
    %108 = vmatprep.subr.mxu0 %v65
    %109 = vmatpush1.msra.mxu0 %v64
    %110 = vmatprep.subr.mxu0 %v67
    %111 = vmatpush1.msra.mxu0 %v66
    %112 = vmatprep.subr.mxu0 %v69
    %113 = vmatpush1.msra.mxu0 %v68
    %114 = vmatprep.subr.mxu0 %v71
    %115 = vmatpush1.msra.mxu0 %v70
    %116 = vmatprep.subr.mxu0 %v73
    %117 = vmatpush1.msra.mxu0 %v72
    %118 = vmatprep.subr.mxu0 %v75
    %119 = vmatpush1.msra.mxu0 %v74
    %120 = vmatprep.subr.mxu0 %v77
    %121 = vmatpush1.msra.mxu0 %v76
    %122 = vmatprep.subr.mxu0 %v79
    %123 = vmatpush1.msra.mxu0 %v78
    %124 = vmatprep.subr.mxu0 %v81
    %125 = vmatpush1.msra.mxu0 %v80
    %126 = vmatprep.subr.mxu0 %v83
    %127 = vmatpush1.msra.mxu0 %v82
    %128 = vmatprep.subr.mxu0 %v85
    %129 = vmatpush1.msra.mxu0 %v84
    %130 = vmatprep.subr.mxu0 %v87
    %131 = vmatpush1.msra.mxu0 %v86
    %132 = vmatprep.subr.mxu0 %v89
    %133 = vmatpush1.msra.mxu0 %v88
    %134 = vmatprep.subr.mxu0 %v91
    %135 = vmatpush1.msra.mxu0 %v90
    %136 = vmatprep.subr.mxu0 %v93
    %137 = vmatpush1.msra.mxu0 %v92
    %138 = vmatprep.subr.mxu0 %v95
    %139 = vmatpush1.msra.mxu0 %v94
    %140 = vmatprep.subr.mxu0 0.0
    %141 = vmatpush1.msra.mxu0 0.0
    %142 = vmatprep.subr.mxu0 0.0
    %143 = vmatpush1.msra.mxu0 0.0
    %144 = vmatprep.subr.mxu0 0.0
    %145 = vmatpush1.msra.mxu0 0.0
    %146 = vmatprep.subr.mxu0 0.0
    %147 = vmatpush1.msra.mxu0 0.0
    %148 = vmatprep.subr.mxu0 0.0
    %149 = vmatpush1.msra.mxu0 0.0
    %150 = vmatprep.subr.mxu0 0.0
    %151 = vmatpush1.msra.mxu0 0.0
    %152 = vmatprep.subr.mxu0 0.0
    %153 = vmatpush1.msra.mxu0 0.0
    %154 = vmatprep.subr.mxu0 0.0
    %155 = vmatpush1.msra.mxu0 0.0
    %156 = vmatprep.subr.mxu0 0.0
    %157 = vmatpush1.msra.mxu0 0.0
    %158 = vmatprep.subr.mxu0 0.0
    %159 = vmatpush1.msra.mxu0 0.0
    %160 = vmatprep.subr.mxu0 0.0
    %161 = vmatpush1.msra.mxu0 0.0
    %162 = vmatprep.subr.mxu0 0.0
    %163 = vmatpush1.msra.mxu0 0.0
    %164 = vmatprep.subr.mxu0 0.0
    %165 = vmatpush1.msra.mxu0 0.0
    %166 = vmatprep.subr.mxu0 0.0
    %167 = vmatpush1.msra.mxu0 0.0
    %168 = vmatprep.subr.mxu0 0.0
    %169 = vmatpush1.msra.mxu0 0.0
    %170 = vmatprep.subr.mxu0 0.0
    %171 = vmatpush1.msra.mxu0 0.0
    %172 = vmatprep.mubr.f32.mxu0 0.0
    %173 = vmatmul.mubr.f32.gmra.mrb[0].mxu0 %v62
    %v174 = vpop.f32.mrb[0].mxu0
    %v175 = vadd.f32 %v101, %v174
    %v176 = vpop.f32.mrb[0].mxu0
    %v177 = vadd.f32 %v105, %v176
    %178 = vmatprep.mubr.f32.mxu0 0.0
    %179 = vmatmul.mubr.f32.gmra.mrb[0].mxu0 %v63
    %v180 = vpop.f32.mrb[0].mxu0
    %v181 = vadd.f32 %v101, %v180
    %v182 = vpop.f32.mrb[0].mxu0
    %v183 = vadd.f32 %v105, %v182
    %184 = vdwg.mxu0
    %v185 = vmul.f32 %v175, 0.5
    %v186 = vmul.f32 %v177, 0.5
    %v187 = vmul.f32 %v181, 0.5
    %v188 = vmul.f32 %v183, 0.5
    %v189 = vmul.f32 %v175, 0.70710677
    %v190 = vmul.f32 %v177, 0.70710677
    %v191 = vmul.f32 %v181, 0.70710677
    %v192 = vmul.f32 %v183, 0.70710677
    %v193 = verf.f32.pop %v189
    %v194 = verf.f32.pop %v190
    %v195 = verf.f32.pop %v191
    %v196 = verf.f32.pop %v192
    %v197 = vadd.f32 %v193, 1.0
    %v198 = vadd.f32 %v194, 1.0
    %v199 = vadd.f32 %v195, 1.0
    %v200 = vadd.f32 %v196, 1.0
    %v201 = vmul.f32 %v185, %v197
    %v202 = vmul.f32 %v186, %v198
    %v203 = vmul.f32 %v187, %v199
    %v204 = vmul.f32 %v188, %v200
    %v205 = vld [vmem:[#allocation7] sm:$0xff]
    %v206 = vld [vmem:[#allocation7 + $0x8] sm:$0xff]
    %v207 = vld [vmem:[#allocation7 + $0x10] sm:$0xff]
    %v208 = vld [vmem:[#allocation7 + $0x18] sm:$0xff]
    %v209 = vld [vmem:[#allocation7 + $0x20] sm:$0xff]
    %v210 = vld [vmem:[#allocation7 + $0x28] sm:$0xff]
    %v211 = vld [vmem:[#allocation7 + $0x30] sm:$0xff]
    %v212 = vld [vmem:[#allocation7 + $0x38] sm:$0xff]
    %v213 = vld [vmem:[#allocation7 + $0x40] sm:$0xff]
    %v214 = vld [vmem:[#allocation7 + $0x48] sm:$0xff]
    %v215 = vld [vmem:[#allocation7 + $0x50] sm:$0xff]
    %v216 = vld [vmem:[#allocation7 + $0x58] sm:$0xff]
    %v217 = vld [vmem:[#allocation7 + $0x60] sm:$0xff]
    %v218 = vld [vmem:[#allocation7 + $0x68] sm:$0xff]
    %v219 = vld [vmem:[#allocation7 + $0x70] sm:$0xff]
    %v220 = vld [vmem:[#allocation7 + $0x78] sm:$0xff]
    %v221 = vld [vmem:[#allocation7 + $0x80] sm:$0xff]
    %v222 = vld [vmem:[#allocation7 + $0x88] sm:$0xff]
    %v223 = vld [vmem:[#allocation7 + $0x90] sm:$0xff]
    %v224 = vld [vmem:[#allocation7 + $0x98] sm:$0xff]
    %v225 = vld [vmem:[#allocation7 + $0xa0] sm:$0xff]
    %v226 = vld [vmem:[#allocation7 + $0xa8] sm:$0xff]
    %v227 = vld [vmem:[#allocation7 + $0xb0] sm:$0xff]
    %v228 = vld [vmem:[#allocation7 + $0xb8] sm:$0xff]
    %v229 = vld [vmem:[#allocation7 + $0xc0] sm:$0xff]
    %v230 = vld [vmem:[#allocation7 + $0xc8] sm:$0xff]
    %v231 = vld [vmem:[#allocation7 + $0xd0] sm:$0xff]
    %v232 = vld [vmem:[#allocation7 + $0xd8] sm:$0xff]
    %v233 = vld [vmem:[#allocation7 + $0xe0] sm:$0xff]
    %v234 = vld [vmem:[#allocation7 + $0xe8] sm:$0xff]
    %v235 = vld [vmem:[#allocation7 + $0xf0] sm:$0xff]
    %v236 = vld [vmem:[#allocation7 + $0xf8] sm:$0xff]
    %v237 = vld [vmem:[#allocation7 + $0x100] sm:$0xff]
    %v238 = vld [vmem:[#allocation7 + $0x108] sm:$0xff]
    %v239 = vld [vmem:[#allocation7 + $0x110] sm:$0xff]
    %v240 = vld [vmem:[#allocation7 + $0x118] sm:$0xff]
    %v241 = vld [vmem:[#allocation7 + $0x120] sm:$0xff]
    %v242 = vld [vmem:[#allocation7 + $0x128] sm:$0xff]
    %v243 = vld [vmem:[#allocation7 + $0x130] sm:$0xff]
    %v244 = vld [vmem:[#allocation7 + $0x138] sm:$0xff]
    %v245 = vld [vmem:[#allocation7 + $0x140] sm:$0xff]
    %v246 = vld [vmem:[#allocation7 + $0x148] sm:$0xff]
    %v247 = vld [vmem:[#allocation7 + $0x150] sm:$0xff]
    %v248 = vld [vmem:[#allocation7 + $0x158] sm:$0xff]
    %v249 = vld [vmem:[#allocation7 + $0x160] sm:$0xff]
    %v250 = vld [vmem:[#allocation7 + $0x168] sm:$0xff]
    %v251 = vld [vmem:[#allocation7 + $0x170] sm:$0xff]
    %v252 = vld [vmem:[#allocation7 + $0x178] sm:$0xff]
    %v253 = vld [vmem:[#allocation7 + $0x180] sm:$0xff]
    %v254 = vld [vmem:[#allocation7 + $0x188] sm:$0xff]
    %v255 = vld [vmem:[#allocation7 + $0x190] sm:$0xff]
    %v256 = vld [vmem:[#allocation7 + $0x198] sm:$0xff]
    %v257 = vld [vmem:[#allocation7 + $0x1a0] sm:$0xff]
    %v258 = vld [vmem:[#allocation7 + $0x1a8] sm:$0xff]
    %v259 = vld [vmem:[#allocation7 + $0x1b0] sm:$0xff]
    %v260 = vld [vmem:[#allocation7 + $0x1b8] sm:$0xff]
    %v261 = vld [vmem:[#allocation7 + $0x1c0] sm:$0xff]
    %v262 = vld [vmem:[#allocation7 + $0x1c8] sm:$0xff]
    %v263 = vld [vmem:[#allocation7 + $0x1d0] sm:$0xff]
    %v264 = vld [vmem:[#allocation7 + $0x1d8] sm:$0xff]
    %v265 = vld [vmem:[#allocation7 + $0x1e0] sm:$0xff]
    %v266 = vld [vmem:[#allocation7 + $0x1e8] sm:$0xff]
    %v267 = vld [vmem:[#allocation7 + $0x1f0] sm:$0xff]
    %v268 = vld [vmem:[#allocation7 + $0x1f8] sm:$0xff]
    %v269 = vld [vmem:[%s4] sm:$0x3]
    %v271 = vlaneseq
    %v272 = vshrl.u32 %v271, 7
    %v273 = vsub.s32 0, %v272
    %v274 = vrot.slane %v269, %v273
    %v275 = vlaneseq
    %v276 = vshrl.u32 %v275, 7
    %v277 = vsub.s32 1, %v276
    %v278 = vrot.slane %v269, %v277
    %281 = vmatprep.subr.mxu0 %v206
    %282 = vmatpush1.msra.mxu0 %v205
    %283 = vmatprep.subr.mxu0 %v208
    %284 = vmatpush1.msra.mxu0 %v207
    %285 = vmatprep.subr.mxu0 %v210
    %286 = vmatpush1.msra.mxu0 %v209
    %287 = vmatprep.subr.mxu0 %v212
    %288 = vmatpush1.msra.mxu0 %v211
    %289 = vmatprep.subr.mxu0 %v214
    %290 = vmatpush1.msra.mxu0 %v213
    %291 = vmatprep.subr.mxu0 %v216
    %292 = vmatpush1.msra.mxu0 %v215
    %293 = vmatprep.subr.mxu0 %v218
    %294 = vmatpush1.msra.mxu0 %v217
    %295 = vmatprep.subr.mxu0 %v220
    %296 = vmatpush1.msra.mxu0 %v219
    %297 = vmatprep.subr.mxu0 %v222
    %298 = vmatpush1.msra.mxu0 %v221
    %299 = vmatprep.subr.mxu0 %v224
    %300 = vmatpush1.msra.mxu0 %v223
    %301 = vmatprep.subr.mxu0 %v226
    %302 = vmatpush1.msra.mxu0 %v225
    %303 = vmatprep.subr.mxu0 %v228
    %304 = vmatpush1.msra.mxu0 %v227
    %305 = vmatprep.subr.mxu0 %v230
    %306 = vmatpush1.msra.mxu0 %v229
    %307 = vmatprep.subr.mxu0 %v232
    %308 = vmatpush1.msra.mxu0 %v231
    %309 = vmatprep.subr.mxu0 %v234
    %310 = vmatpush1.msra.mxu0 %v233
    %311 = vmatprep.subr.mxu0 %v236
    %312 = vmatpush1.msra.mxu0 %v235
    %313 = vmatprep.subr.mxu0 %v238
    %314 = vmatpush1.msra.mxu0 %v237
    %315 = vmatprep.subr.mxu0 %v240
    %316 = vmatpush1.msra.mxu0 %v239
    %317 = vmatprep.subr.mxu0 %v242
    %318 = vmatpush1.msra.mxu0 %v241
    %319 = vmatprep.subr.mxu0 %v244
    %320 = vmatpush1.msra.mxu0 %v243
    %321 = vmatprep.subr.mxu0 %v246
    %322 = vmatpush1.msra.mxu0 %v245
    %323 = vmatprep.subr.mxu0 %v248
    %324 = vmatpush1.msra.mxu0 %v247
    %325 = vmatprep.subr.mxu0 %v250
    %326 = vmatpush1.msra.mxu0 %v249
    %327 = vmatprep.subr.mxu0 %v252
    %328 = vmatpush1.msra.mxu0 %v251
    %329 = vmatprep.subr.mxu0 %v254
    %330 = vmatpush1.msra.mxu0 %v253
    %331 = vmatprep.subr.mxu0 %v256
    %332 = vmatpush1.msra.mxu0 %v255
    %333 = vmatprep.subr.mxu0 %v258
    %334 = vmatpush1.msra.mxu0 %v257
    %335 = vmatprep.subr.mxu0 %v260
    %336 = vmatpush1.msra.mxu0 %v259
    %337 = vmatprep.subr.mxu0 %v262
    %338 = vmatpush1.msra.mxu0 %v261
    %339 = vmatprep.subr.mxu0 %v264
    %340 = vmatpush1.msra.mxu0 %v263
    %341 = vmatprep.subr.mxu0 %v266
    %342 = vmatpush1.msra.mxu0 %v265
    %343 = vmatprep.subr.mxu0 %v268
    %344 = vmatpush1.msra.mxu0 %v267
    %345 = vmatprep.mubr.f32.mxu0 %v202
    %346 = vmatmul.mubr.f32.gmra.mrb[0].mxu0 %v201
    %v347 = vpop.f32.mrb[0].mxu0
    %v348 = vadd.f32 %v274, %v347
    %v349 = vpop.f32.mrb[0].mxu0
    %v350 = vadd.f32 %v278, %v349
    %351 = vmatprep.mubr.f32.mxu0 %v204
    %352 = vmatmul.mubr.f32.gmra.mrb[0].mxu0 %v203
    %v353 = vpop.f32.mrb[0].mxu0
    %v354 = vadd.f32 %v274, %v353
    %v355 = vpop.f32.mrb[0].mxu0
    %v356 = vadd.f32 %v278, %v355
    %357 = vdwg.mxu0
    %358 = vst [vmem:[#allocation8] sm:$0xff] %v348
    %359 = vst [vmem:[#allocation8 + $0x8] sm:$0xff] %v350
    %360 = vst [vmem:[#allocation8 + $0x10] sm:$0xff] %v354
    %361 = vst [vmem:[#allocation8 + $0x18] sm:$0xff] %v356
    // Predicated region
    $region34: #{tpu_custom_call.1} parent=1 // pred_check
      _
    $region35: #{tpu_custom_call.1} parent=1 // pred_check_branch
      %363 = sbr.rel (0) target = $region37
    $region36: #{tpu_custom_call.1} parent=1 // pred_region
      %s365 = ssub.s32 512, 512
      %366 = vsyncadd [#allocation4], %s365
      %s367 = sshll.u32 [#allocation8], 4
      %s368 = int_to_ptr.vmem [resolvable:$true] %s367
      %373 = dma.vmem_to_hbm [thread:$0]  %s368, 512, %s5, [#allocation4], 256, 256, 16
    $region37: #{tpu_custom_call.1} parent=1 // pred_fallthru
      _
    // Predicated region
    $region38: #{tpu_custom_call.1} parent=1 // pred_check
      _
    $region39: #{tpu_custom_call.1} parent=1 // pred_check_branch
      %375 = sbr.rel (0) target = $region41
    $region40: #{tpu_custom_call.1} parent=1 // pred_region
      %376 = dma.done [#allocation4], 512
    $region41: #{tpu_custom_call.1} parent=1 // pred_fallthru
      _
    %377 = vsyncpa [#allocation3], 1
    %378 = vsyncpa [#allocation6], 1
    %379 = vsyncpa [#allocation4], 1

</llo_original>
